<compile_context>
chip_gen: v5e
topology: v5e:2x2
jax: 0.10.0
libtpu: 0.0.40
codegen_flags: <defaults>
</compile_context>

<pallas_src>
import functools
import math

import jax
import jax.numpy as jnp
from jax.experimental import pallas as pl
from jax.experimental.pallas import tpu as pltpu


def _apply_affine(o_ref, norm, gamma, beta):
    """o = gamma * norm + beta; done in bf16 when the output is bf16."""
    if o_ref.dtype == jnp.bfloat16:
        o_ref[...] = (gamma.astype(jnp.bfloat16) * norm.astype(jnp.bfloat16)
                      + beta.astype(jnp.bfloat16))
    else:
        o_ref[...] = (gamma * norm + beta).astype(o_ref.dtype)


def _layer_norm_kernel(x_ref, gamma_ref, beta_ref, o_ref, *, eps, d_model):
    """Standard path: one LayerNorm instance per row (width == d_model)."""
    x = x_ref[...].astype(jnp.float32)          # (rt, d_model)
    gamma = gamma_ref[...]                      # (1, d_model) f32
    beta = beta_ref[...]                        # (1, d_model) f32
    inv_d = jnp.float32(1.0 / d_model)

    mean = jnp.sum(x, axis=-1, keepdims=True) * inv_d
    centered = x - mean
    # Two-pass variance on the VMEM-resident tile (no extra HBM traffic).
    var = jnp.sum(centered * centered, axis=-1, keepdims=True) * inv_d
    inv_std = jax.lax.rsqrt(var + eps)
    _apply_affine(o_ref, centered * inv_std, gamma, beta)


def _layer_norm_kernel_folded(x_ref, gamma_ref, beta_ref, blk_ref, o_ref, *,
                              eps, d_model):
    """Lane-folded path: `groups` logical rows per physical 128-lane row.

    Per-segment sums are computed on the MXU with a VMEM-resident 0/1
    block-diagonal matrix (exact in bf16); x is split hi/lo so the result is
    ~f32-exact with only two bf16 MXU passes per sum (no precision=HIGHEST).
    """
    x = x_ref[...].astype(jnp.float32)          # (rt, width)
    gamma = gamma_ref[...]                      # (1, width) f32
    beta = beta_ref[...]                        # (1, width) f32
    blk = blk_ref[...]                          # (width, width) bf16 0/1
    inv_d = jnp.float32(1.0 / d_model)

    def seg_sum(v):
        hi = v.astype(jnp.bfloat16)
        lo = (v - hi.astype(jnp.float32)).astype(jnp.bfloat16)
        return (jnp.dot(hi, blk, preferred_element_type=jnp.float32)
                + jnp.dot(lo, blk, preferred_element_type=jnp.float32))

    mean = seg_sum(x) * inv_d                   # already broadcast per segment
    centered = x - mean
    var = seg_sum(centered * centered) * inv_d  # two-pass variance
    inv_std = jax.lax.rsqrt(var + eps)
    _apply_affine(o_ref, centered * inv_std, gamma, beta)


def _choose_groups(d_model, rows):
    """Rows folded along the lane axis; never requires padding the input."""
    if d_model >= 128 or 128 % d_model != 0:
        # TODO(synk): generalize folding to width = lcm(d_model, 128) (e.g.
        # d_model=96) using a compact (width, groups) sum matrix so the MXU
        # cost stays O(groups) per element instead of O(width).
        return 1
    full_groups = 128 // d_model
    for g in range(full_groups, 0, -1):
        if full_groups % g == 0 and rows % g == 0:
            return g
    return 1


def layer_norm(x, gamma, beta, *, eps=1e-12,
               target_block_bytes=4 * 1024 * 1024):
    """LayerNorm over the last axis of x. gamma/beta have shape (d_model,)."""
    orig_shape = x.shape
    d_model = orig_shape[-1]
    rows = 1
    for s in orig_shape[:-1]:
        rows *= s

    groups = _choose_groups(d_model, rows)
    width = groups * d_model
    rows_g = rows // groups
    x2 = x.reshape(rows_g, width)               # contiguous reshape, no copy

    # Row tile: ~target_block_bytes per block (kernel is HBM-bound), rounded
    # to the sublane packing multiple of the input dtype (8 f32 / 16 bf16).
    elt = jnp.dtype(x.dtype).itemsize
    sub = max(8, 32 // elt)
    rt = max(target_block_bytes // (width * elt), sub)
    rt = (rt // sub) * sub
    if rt >= rows_g:
        rt = rows_g                             # one (possibly ragged) block

    # Generation-aware VMEM budget: double-buffered in/out blocks plus the f32
    # temporaries of the chosen path, capped at 75% of physical VMEM.
    try:
        vmem_cap = int(getattr(pltpu.get_tpu_info(), "vmem_capacity_bytes",
                               64 << 20))
    except Exception:  # pragma: no cover - conservative fallback (v7x per-TC)
        vmem_cap = 64 << 20
    vmem_cap = (vmem_cap * 3) // 4

    n_f32_tmp = 6 if groups > 1 else 4

    def vmem_estimate(r):
        return 4 * r * width * elt + n_f32_tmp * r * width * 4 + (4 << 20)

    while rt > sub and vmem_estimate(rt) > vmem_cap:
        rt = max(((rt // 2) // sub) * sub, sub)
    vmem_limit = int(min(max(vmem_estimate(rt), 16 << 20), vmem_cap))

    grid = (pl.cdiv(rows_g, rt),)               # ragged final block is masked

    # gamma/beta: pre-cast to f32 once, tiled across folded groups; constant
    # block index keeps them VMEM-resident across grid steps.
    gamma2 = jnp.tile(gamma.astype(jnp.float32), groups).reshape(1, width)
    beta2 = jnp.tile(beta.astype(jnp.float32), groups).reshape(1, width)

    in_specs = [
        pl.BlockSpec((rt, width), lambda i: (i, 0)),
        pl.BlockSpec((1, width), lambda i: (0, 0)),
        pl.BlockSpec((1, width), lambda i: (0, 0)),
    ]
    args = [x2, gamma2, beta2]

    if groups > 1:
        seg = jnp.arange(width, dtype=jnp.int32) // d_model
        blk = (seg[:, None] == seg[None, :]).astype(jnp.bfloat16)
        in_specs.append(pl.BlockSpec((width, width), lambda i: (0, 0)))
        args.append(blk)
        kernel = functools.partial(_layer_norm_kernel_folded,
                                   eps=eps, d_model=d_model)
    else:
        kernel = functools.partial(_layer_norm_kernel,
                                   eps=eps, d_model=d_model)

    out2 = pl.pallas_call(
        kernel,
        out_shape=jax.ShapeDtypeStruct((rows_g, width), x.dtype),
        grid_spec=pltpu.PrefetchScalarGridSpec(
            num_scalar_prefetch=0,
            grid=grid,
            in_specs=in_specs,
            out_specs=pl.BlockSpec((rt, width), lambda i: (i, 0)),
        ),
        # TODO(synk): on v7x, if a trace shows single-TensorCore execution,
        # switch this axis to pltpu.CORE_PARALLEL to shard rows across both TCs.
        compiler_params=pltpu.CompilerParams(
            dimension_semantics=("parallel",),
            vmem_limit_bytes=vmem_limit,
        ),
    )(*args)

    return out2.reshape(orig_shape)


def _reference(x, gamma, beta, eps):
    x = x.astype(jnp.float32)
    mean = jnp.mean(x, axis=-1, keepdims=True)
    var = jnp.mean((x - mean) ** 2, axis=-1, keepdims=True)
    return gamma * ((x - mean) / jnp.sqrt(var + eps)) + beta


if __name__ == "__main__":
    eps = 1e-12
    key = jax.random.PRNGKey(0)
    k1, k2, k3, k4, k5 = jax.random.split(key, 5)

    # Case 1: narrow d_model (divides 128) -> lane-folded path, single block.
    x = jax.random.normal(k1, (2, 8, 32), dtype=jnp.float32)
    g = jnp.ones((32,), jnp.float32)
    b = jnp.zeros((32,), jnp.float32)
    out = jax.block_until_ready(layer_norm(x, g, b, eps=eps))
    assert jnp.allclose(out, _reference(x, g, b, eps), atol=1e-4, rtol=1e-4), \
        "mismatch (narrow d_model, folded)"

    # Case 2: wide d_model with a ragged row count (15 rows) -> standard path.
    x = jax.random.normal(k2, (3, 5, 128), dtype=jnp.float32)
    g = jnp.ones((128,), jnp.float32)
    b = jnp.zeros((128,), jnp.float32)
    out = jax.block_until_ready(layer_norm(x, g, b, eps=eps))
    assert jnp.allclose(out, _reference(x, g, b, eps), atol=1e-4, rtol=1e-4), \
        "mismatch (wide d_model)"

    # Case 3: folded path, multiple grid steps with a ragged (masked) final
    # block: rows_g=50, rt=16 -> grid=4, last block only partially valid.
    x = jax.random.normal(k3, (2, 50, 64), dtype=jnp.float32)
    g = jnp.ones((64,), jnp.float32)
    b = jnp.zeros((64,), jnp.float32)
    out = jax.block_until_ready(
        layer_norm(x, g, b, eps=eps, target_block_bytes=8192))
    assert jnp.allclose(out, _reference(x, g, b, eps), atol=1e-4, rtol=1e-4), \
        "mismatch (ragged multi-block, folded)"

    # Case 4: bf16 input/output -> f32 statistics, bf16 affine apply.
    x = jax.random.normal(k4, (2, 8, 128), dtype=jnp.bfloat16)
    g = jnp.ones((128,), jnp.float32)
    b = jnp.zeros((128,), jnp.float32)
    out = jax.block_until_ready(layer_norm(x, g, b, eps=eps))
    assert jnp.allclose(out.astype(jnp.float32), _reference(x, g, b, eps),
                        atol=3e-2, rtol=3e-2), "mismatch (bf16)"

    # Case 5: narrow d_model that does not divide 128 -> groups=1 fallback.
    x = jax.random.normal(k5, (3, 7, 96), dtype=jnp.float32)
    g = jnp.ones((96,), jnp.float32)
    b = jnp.zeros((96,), jnp.float32)
    out = jax.block_until_ready(layer_norm(x, g, b, eps=eps))
    assert jnp.allclose(out, _reference(x, g, b, eps), atol=1e-4, rtol=1e-4), \
        "mismatch (narrow non-dividing d_model)"

    print("KERNEL_OK")
</pallas_src>

<mosaic_0001>
module attributes {stable_mosaic.version = 11 : i64} {
  func.func @_layer_norm_kernel_folded(%arg0: i32, %arg1: memref<4x128xf32, #tpu.memory_space<vmem>>, %arg2: memref<1x128xf32, #tpu.memory_space<vmem>>, %arg3: memref<1x128xf32, #tpu.memory_space<vmem>>, %arg4: memref<128x128xbf16, #tpu.memory_space<vmem>>, %arg5: memref<4x128xf32, #tpu.memory_space<vmem>>) attributes {dimension_semantics = [#tpu.dimension_semantics<parallel>], iteration_bounds = array<i64: 1>, scalar_prefetch = 0 : i64, scratch_operands = 0 : i64, tpu.core_type = #tpu.core_type<tc>, window_params = [{transform_indices = @transform_0, window_bounds = array<i64: 4, 128>}, {pipeline_mode = #tpu.pipeline_mode<synchronous>, transform_indices = @transform_1, window_bounds = array<i64: 1, 128>}, {pipeline_mode = #tpu.pipeline_mode<synchronous>, transform_indices = @transform_2, window_bounds = array<i64: 1, 128>}, {pipeline_mode = #tpu.pipeline_mode<synchronous>, transform_indices = @transform_3, window_bounds = array<i64: 128, 128>}, {transform_indices = @transform_4, window_bounds = array<i64: 4, 128>}]} {
    %c0 = arith.constant 0 : index
    %c0_0 = arith.constant 0 : index
    %0 = vector.load %arg1[%c0, %c0_0] : memref<4x128xf32, #tpu.memory_space<vmem>>, vector<4x128xf32>
    %c0_1 = arith.constant 0 : index
    %c0_2 = arith.constant 0 : index
    %1 = vector.load %arg2[%c0_1, %c0_2] : memref<1x128xf32, #tpu.memory_space<vmem>>, vector<1x128xf32>
    %c0_3 = arith.constant 0 : index
    %c0_4 = arith.constant 0 : index
    %2 = vector.load %arg3[%c0_3, %c0_4] : memref<1x128xf32, #tpu.memory_space<vmem>>, vector<1x128xf32>
    %c0_5 = arith.constant 0 : index
    %c0_6 = arith.constant 0 : index
    %3 = vector.load %arg4[%c0_5, %c0_6] : memref<128x128xbf16, #tpu.memory_space<vmem>>, vector<128x128xbf16>
    %4 = arith.truncf %0 : vector<4x128xf32> to vector<4x128xbf16>
    %5 = arith.extf %4 : vector<4x128xbf16> to vector<4x128xf32>
    %6 = arith.subf %0, %5 : vector<4x128xf32>
    %7 = arith.truncf %6 : vector<4x128xf32> to vector<4x128xbf16>
    %cst = arith.constant dense<0.000000e+00> : vector<4x128xf32>
    %8 = tpu.matmul %4, %3, %cst {dimension_numbers = #tpu.dot_dimension_numbers<[1], [0], [0], [1], [0, 0, 1, 1], [], []>} : vector<4x128xbf16>, vector<128x128xbf16>, vector<4x128xf32> -> vector<4x128xf32>
    %cst_7 = arith.constant dense<0.000000e+00> : vector<4x128xf32>
    %9 = tpu.matmul %7, %3, %cst_7 {dimension_numbers = #tpu.dot_dimension_numbers<[1], [0], [0], [1], [0, 0, 1, 1], [], []>} : vector<4x128xbf16>, vector<128x128xbf16>, vector<4x128xf32> -> vector<4x128xf32>
    %10 = arith.addf %8, %9 : vector<4x128xf32>
    %cst_8 = arith.constant 3.125000e-02 : f32
    %11 = vector.broadcast %cst_8 : f32 to vector<4x128xf32>
    %12 = arith.mulf %10, %11 : vector<4x128xf32>
    %13 = arith.subf %0, %12 : vector<4x128xf32>
    %14 = arith.mulf %13, %13 : vector<4x128xf32>
    %15 = arith.truncf %14 : vector<4x128xf32> to vector<4x128xbf16>
    %16 = arith.extf %15 : vector<4x128xbf16> to vector<4x128xf32>
    %17 = arith.subf %14, %16 : vector<4x128xf32>
    %18 = arith.truncf %17 : vector<4x128xf32> to vector<4x128xbf16>
    %cst_9 = arith.constant dense<0.000000e+00> : vector<4x128xf32>
    %19 = tpu.matmul %15, %3, %cst_9 {dimension_numbers = #tpu.dot_dimension_numbers<[1], [0], [0], [1], [0, 0, 1, 1], [], []>} : vector<4x128xbf16>, vector<128x128xbf16>, vector<4x128xf32> -> vector<4x128xf32>
    %cst_10 = arith.constant dense<0.000000e+00> : vector<4x128xf32>
    %20 = tpu.matmul %18, %3, %cst_10 {dimension_numbers = #tpu.dot_dimension_numbers<[1], [0], [0], [1], [0, 0, 1, 1], [], []>} : vector<4x128xbf16>, vector<128x128xbf16>, vector<4x128xf32> -> vector<4x128xf32>
    %21 = arith.addf %19, %20 : vector<4x128xf32>
    %cst_11 = arith.constant 3.125000e-02 : f32
    %22 = vector.broadcast %cst_11 : f32 to vector<4x128xf32>
    %23 = arith.mulf %21, %22 : vector<4x128xf32>
    %cst_12 = arith.constant 9.99999996E-13 : f32
    %24 = vector.broadcast %cst_12 : f32 to vector<4x128xf32>
    %25 = arith.addf %23, %24 : vector<4x128xf32>
    %26 = math.rsqrt %25 : vector<4x128xf32>
    %27 = arith.mulf %13, %26 : vector<4x128xf32>
    %28 = vector.broadcast %1 : vector<1x128xf32> to vector<4x128xf32>
    %29 = arith.mulf %28, %27 : vector<4x128xf32>
    %30 = vector.broadcast %2 : vector<1x128xf32> to vector<4x128xf32>
    %31 = arith.addf %29, %30 : vector<4x128xf32>
    %c0_13 = arith.constant 0 : index
    %c0_14 = arith.constant 0 : index
    %32 = vector.load %arg5[%c0_13, %c0_14] : memref<4x128xf32, #tpu.memory_space<vmem>>, vector<4x128xf32>
    tpu.vector_store %arg5[%c0_13, %c0_14], %31 {strides = array<i32>} : memref<4x128xf32, #tpu.memory_space<vmem>>, vector<4x128xf32>,
    return
  }
  func.func @transform_0(%arg0: i32) -> (i32, i32) {
    %c0_i32 = arith.constant 0 : i32
    %c0_i32_0 = arith.constant 0 : i32
    return %arg0, %c0_i32 : i32, i32
  }
  func.func @transform_1(%arg0: i32) -> (i32, i32) {
    %c0_i32 = arith.constant 0 : i32
    %c0_i32_0 = arith.constant 0 : i32
    %c0_i32_1 = arith.constant 0 : i32
    return %c0_i32, %c0_i32_0 : i32, i32
  }
  func.func @transform_2(%arg0: i32) -> (i32, i32) {
    %c0_i32 = arith.constant 0 : i32
    %c0_i32_0 = arith.constant 0 : i32
    %c0_i32_1 = arith.constant 0 : i32
    return %c0_i32, %c0_i32_0 : i32, i32
  }
  func.func @transform_3(%arg0: i32) -> (i32, i32) {
    %c0_i32 = arith.constant 0 : i32
    %c0_i32_0 = arith.constant 0 : i32
    %c0_i32_1 = arith.constant 0 : i32
    return %c0_i32, %c0_i32_0 : i32, i32
  }
  func.func @transform_4(%arg0: i32) -> (i32, i32) {
    %c0_i32 = arith.constant 0 : i32
    %c0_i32_0 = arith.constant 0 : i32
    return %arg0, %c0_i32 : i32, i32
  }
}

</mosaic_0001>

<llo_original>
// kernel: tpu_custom_call.1
$region0: #{tpu_custom_call.1}
  #allocation0 [shape = 'u32[]', space=smem, size = 0x4, offset = 0x4, fixed_abs, tag = 'smem constant byte address 0x4 - core index']
  #allocation1 [shape = 'u32[72,128]{1,0:T(1,128)}', space=vmem, size = 0x9000, scoped, tag = 'internal scratch']
  %s0 = inlined_call_operand.hbm [shape: f32[4,128], index: 0, kind: input, shape index: {}]
  %s1 = inlined_call_operand.hbm [shape: f32[1,128], index: 1, kind: input, shape index: {}]
  %s2 = inlined_call_operand.vmem [shape: f32[1,128], index: 2, kind: input, shape index: {}]
  %s3 = inlined_call_operand.hbm [shape: bf16[128,128], index: 3, kind: input, shape index: {}]
  %s4 = inlined_call_operand.hbm [shape: f32[4,128], index: 4, kind: output, shape index: {}]
  %s5 = sld [smem:[#allocation0]]
  $region38: #{tpu_custom_call.1} parent=0
    _
  %s7 = ssub.s32 1, %s5
  %s8 = scalar_select 0, %s7, %s5
  $region1: #{tpu_custom_call.1} parent=0
    #allocation2 [shape = 'u8[2048]{0}', space=vmem, size = 0x800, scoped, tag = 'input window, operand 0, single buffered']
    #allocation3 [shape = 's32[1]{0}', space=sflag, size = 0x4, scoped, tag = 'scoped memory for tpu_custom_call.1']
    #allocation4 [shape = 's32[1]{0}', space=sflag, size = 0x4, scoped, tag = 'scoped memory for tpu_custom_call.1']
    #allocation5 [shape = 'u8[512]{0}', space=vmem, size = 0x400, scoped, tag = 'input window, operand 1, single buffered']
    #allocation6 [shape = 's32[1]{0}', space=sflag, size = 0x4, scoped, tag = 'scoped memory for tpu_custom_call.1']
    #allocation7 [shape = 'u8[32768]{0}', space=vmem, size = 0x8000, scoped, tag = 'input window, operand 3, single buffered']
    #allocation8 [shape = 'u8[2048]{0}', space=vmem, size = 0x800, scoped, tag = 'output window, operand 0, single buffered']
    %9 = vsyncpa [#allocation3], 0
    %10 = vsyncpa [#allocation6], 0
    %11 = vsyncpa [#allocation4], 0
    // Predicated region
    $region2: #{tpu_custom_call.1} parent=1 // pred_check
      _
    $region3: #{tpu_custom_call.1} parent=1 // pred_check_branch
      %13 = sbr.rel (0) target = $region5
    $region4: #{tpu_custom_call.1} parent=1 // pred_region
      %15 = vsyncadd [#allocation3], 0
      %s17 = sshll.u32 %s0, 4
      %s18 = int_to_ptr.hbm [resolvable:$true] %s17
      %s19 = sshll.u32 [#allocation2], 4
      %s20 = int_to_ptr.vmem [resolvable:$true] %s19
      %22 = dma.hbm_to_vmem [thread:$0]  %s18, 64, %s20, [#allocation3]
    $region5: #{tpu_custom_call.1} parent=1 // pred_fallthru
      _
    // Predicated region
    $region6: #{tpu_custom_call.1} parent=1 // pred_check
      _
    $region7: #{tpu_custom_call.1} parent=1 // pred_check_branch
      %24 = sbr.rel (0) target = $region9
    $region8: #{tpu_custom_call.1} parent=1 // pred_region
      %26 = vsyncadd [#allocation6], 0
      %s28 = sshll.u32 %s1, 4
      %s29 = int_to_ptr.hbm [resolvable:$true] %s28
      %s30 = sshll.u32 [#allocation5], 4
      %s31 = int_to_ptr.vmem [resolvable:$true] %s30
      %33 = dma.hbm_to_vmem [thread:$0]  %s29, 16, %s31, [#allocation6]
    $region9: #{tpu_custom_call.1} parent=1 // pred_fallthru
      _
    // Predicated region
    $region10: #{tpu_custom_call.1} parent=1 // pred_check
      _
    $region11: #{tpu_custom_call.1} parent=1 // pred_check_branch
      %35 = sbr.rel (0) target = $region13
    $region12: #{tpu_custom_call.1} parent=1 // pred_region
      _
    $region13: #{tpu_custom_call.1} parent=1 // pred_fallthru
      _
    // Predicated region
    $region14: #{tpu_custom_call.1} parent=1 // pred_check
      _
    $region15: #{tpu_custom_call.1} parent=1 // pred_check_branch
      %37 = sbr.rel (0) target = $region17
    $region16: #{tpu_custom_call.1} parent=1 // pred_region
      %39 = vsyncadd [#allocation6], 0
      %s40 = sshll.u32 %s3, 4
      %s41 = int_to_ptr.hbm [resolvable:$true] %s40
      %s42 = sshll.u32 [#allocation7], 4
      %s43 = int_to_ptr.vmem [resolvable:$true] %s42
      %48 = dma.hbm_to_vmem [thread:$0]  %s41, 1024, %s43, [#allocation6], 64, 64, 4
    $region17: #{tpu_custom_call.1} parent=1 // pred_fallthru
      _
    // Predicated region
    $region18: #{tpu_custom_call.1} parent=1 // pred_check
      _
    $region19: #{tpu_custom_call.1} parent=1 // pred_check_branch
      %50 = sbr.rel (0) target = $region21
    $region20: #{tpu_custom_call.1} parent=1 // pred_region
      %52 = dma.done [#allocation3], 64
    $region21: #{tpu_custom_call.1} parent=1 // pred_fallthru
      _
    // Predicated region
    $region22: #{tpu_custom_call.1} parent=1 // pred_check
      _
    $region23: #{tpu_custom_call.1} parent=1 // pred_check_branch
      %54 = sbr.rel (0) target = $region25
    $region24: #{tpu_custom_call.1} parent=1 // pred_region
      %56 = dma.done [#allocation6], 16
    $region25: #{tpu_custom_call.1} parent=1 // pred_fallthru
      _
    // Predicated region
    $region26: #{tpu_custom_call.1} parent=1 // pred_check
      _
    $region27: #{tpu_custom_call.1} parent=1 // pred_check_branch
      %58 = sbr.rel (0) target = $region29
    $region28: #{tpu_custom_call.1} parent=1 // pred_region
      %60 = dma.done [#allocation6], 1024
    $region29: #{tpu_custom_call.1} parent=1 // pred_fallthru
      _
    %v61 = vld [vmem:[#allocation2] sm:$0xf]
    %v62 = vld [vmem:[#allocation5] sm:$0x1]
    %v63 = vld [vmem:[%s2] sm:$0x1]
    %v64 = vld [vmem:[#allocation7] sm:$0xf]
    %v65 = vld [vmem:[#allocation7 + $0x4] sm:$0xf]
    %v66 = vld [vmem:[#allocation7 + $0x8] sm:$0xf]
    %v67 = vld [vmem:[#allocation7 + $0xc] sm:$0xf]
    %v68 = vld [vmem:[#allocation7 + $0x10] sm:$0xf]
    %v69 = vld [vmem:[#allocation7 + $0x14] sm:$0xf]
    %v70 = vld [vmem:[#allocation7 + $0x18] sm:$0xf]
    %v71 = vld [vmem:[#allocation7 + $0x1c] sm:$0xf]
    %v72 = vld [vmem:[#allocation7 + $0x20] sm:$0xf]
    %v73 = vld [vmem:[#allocation7 + $0x24] sm:$0xf]
    %v74 = vld [vmem:[#allocation7 + $0x28] sm:$0xf]
    %v75 = vld [vmem:[#allocation7 + $0x2c] sm:$0xf]
    %v76 = vld [vmem:[#allocation7 + $0x30] sm:$0xf]
    %v77 = vld [vmem:[#allocation7 + $0x34] sm:$0xf]
    %v78 = vld [vmem:[#allocation7 + $0x38] sm:$0xf]
    %v79 = vld [vmem:[#allocation7 + $0x3c] sm:$0xf]
    %v80 = vpack.c.bf16 %v61, %v61
    %v81 = vunpack.c.l.bf16 %v80
    %v82 = vsub.f32 %v61, %v81
    %v83 = vpack.c.bf16 %v82, %v82
    %v100 = vunpack.c.l.b16 %v64
    %v101 = vunpack.c.l.b16 %v65
    %v102 = vunpack.c.l.b16 %v66
    %v103 = vunpack.c.l.b16 %v67
    %v104 = vunpack.c.l.b16 %v68
    %v105 = vunpack.c.l.b16 %v69
    %v106 = vunpack.c.l.b16 %v70
    %v107 = vunpack.c.l.b16 %v71
    %v108 = vunpack.c.l.b16 %v72
    %v109 = vunpack.c.l.b16 %v73
    %v110 = vunpack.c.l.b16 %v74
    %v111 = vunpack.c.l.b16 %v75
    %v112 = vunpack.c.l.b16 %v76
    %v113 = vunpack.c.l.b16 %v77
    %v114 = vunpack.c.l.b16 %v78
    %v115 = vunpack.c.l.b16 %v79
    %v116 = vpack.c.b16 %v101, %v100
    %v117 = vpack.c.b16 %v103, %v102
    %v118 = vpack.c.b16 %v105, %v104
    %v119 = vpack.c.b16 %v107, %v106
    %v120 = vpack.c.b16 %v109, %v108
    %v121 = vpack.c.b16 %v111, %v110
    %v122 = vpack.c.b16 %v113, %v112
    %v123 = vpack.c.b16 %v115, %v114
    %132 = vmatpush.bf16.msra.mxu0 %v123
    %133 = vmatpush.bf16.msra.mxu0 %v122
    %134 = vmatpush.bf16.msra.mxu0 %v121
    %135 = vmatpush.bf16.msra.mxu0 %v120
    %136 = vmatpush.bf16.msra.mxu0 %v119
    %137 = vmatpush.bf16.msra.mxu0 %v118
    %138 = vmatpush.bf16.msra.mxu0 %v117
    %139 = vmatpush.bf16.msra.mxu0 %v116
    %140 = vmatmul.bf16.gmra.mxu0 %v83
    %v141 = vpop.f32.mrf.mxu0
    %v142 = vadd.f32 0.0, %v141
    %v143 = vpop.f32.mrf.mxu0
    %144 = vdwg.mxu0
    %145 = vmatpush.bf16.msra.mxu0 %v123
    %146 = vmatpush.bf16.msra.mxu0 %v122
    %147 = vmatpush.bf16.msra.mxu0 %v121
    %148 = vmatpush.bf16.msra.mxu0 %v120
    %149 = vmatpush.bf16.msra.mxu0 %v119
    %150 = vmatpush.bf16.msra.mxu0 %v118
    %151 = vmatpush.bf16.msra.mxu0 %v117
    %152 = vmatpush.bf16.msra.mxu0 %v116
    %153 = vmatmul.bf16.gmra.mxu0 %v80
    %v154 = vpop.f32.mrf.mxu0
    %v155 = vadd.f32 %v142, %v154
    %v156 = vpop.f32.mrf.mxu0
    %157 = vdwg.mxu0
    %v158 = vmul.f32 %v155, 0.03125
    %v159 = vsub.f32 %v61, %v158
    %v160 = vmul.f32 %v159, %v159
    %v161 = vpack.c.bf16 %v160, %v160
    %v162 = vunpack.c.l.bf16 %v161
    %v163 = vsub.f32 %v160, %v162
    %v164 = vpack.c.bf16 %v163, %v163
    %165 = vmatpush.bf16.msra.mxu0 %v123
    %166 = vmatpush.bf16.msra.mxu0 %v122
    %167 = vmatpush.bf16.msra.mxu0 %v121
    %168 = vmatpush.bf16.msra.mxu0 %v120
    %169 = vmatpush.bf16.msra.mxu0 %v119
    %170 = vmatpush.bf16.msra.mxu0 %v118
    %171 = vmatpush.bf16.msra.mxu0 %v117
    %172 = vmatpush.bf16.msra.mxu0 %v116
    %173 = vmatmul.bf16.gmra.mxu0 %v164
    %v174 = vpop.f32.mrf.mxu0
    %v175 = vadd.f32 0.0, %v174
    %v176 = vpop.f32.mrf.mxu0
    %177 = vdwg.mxu0
    %178 = vmatpush.bf16.msra.mxu0 %v123
    %179 = vmatpush.bf16.msra.mxu0 %v122
    %180 = vmatpush.bf16.msra.mxu0 %v121
    %181 = vmatpush.bf16.msra.mxu0 %v120
    %182 = vmatpush.bf16.msra.mxu0 %v119
    %183 = vmatpush.bf16.msra.mxu0 %v118
    %184 = vmatpush.bf16.msra.mxu0 %v117
    %185 = vmatpush.bf16.msra.mxu0 %v116
    %186 = vmatmul.bf16.gmra.mxu0 %v161
    %v187 = vpop.f32.mrf.mxu0
    %v188 = vadd.f32 %v175, %v187
    %v189 = vpop.f32.mrf.mxu0
    %190 = vdwg.mxu0
    %v191 = vmul.f32 %v188, 0.03125
    %v192 = vadd.f32 %v191, 1e-12
    %v193 = vrsqrt.pop %v192
    %v194 = vmul.f32 %v193, %v192
    %v195 = vmul.f32 %v194, %v193
    %v196 = vmul.f32 0.5, %v195
    %v197 = vsub.f32 1.5, %v196
    %v198 = vmul.f32 %v193, %v197
    %vm199 = vweird.f32 %v192
    %vm200 = vweird.f32 %v193
    %vm201 = vmor %vm199, %vm200
    %v202 = vsel %vm201, %v193, %v198
    %v203 = vmul.f32 %v159, %v202
    %v205 = vperm.slane %v62, 0
    %v207 = vmul.f32 %v205, %v203
    %v209 = vperm.slane %v63, 0
    %v211 = vadd.f32 %v207, %v209
    %212 = vst [vmem:[#allocation8] sm:$0xf] %v211
    // Predicated region
    $region30: #{tpu_custom_call.1} parent=1 // pred_check
      _
    $region31: #{tpu_custom_call.1} parent=1 // pred_check_branch
      %214 = sbr.rel (0) target = $region33
    $region32: #{tpu_custom_call.1} parent=1 // pred_region
      %216 = vsyncadd [#allocation4], 0
      %s218 = sshll.u32 [#allocation8], 4
      %s219 = int_to_ptr.vmem [resolvable:$true] %s218
      %s220 = sshll.u32 %s4, 4
      %s221 = int_to_ptr.hbm [resolvable:$true] %s220
      %223 = dma.vmem_to_hbm [thread:$0]  %s219, 64, %s221, [#allocation4]
    $region33: #{tpu_custom_call.1} parent=1 // pred_fallthru
      _
    // Predicated region
    $region34: #{tpu_custom_call.1} parent=1 // pred_check
      _
    $region35: #{tpu_custom_call.1} parent=1 // pred_check_branch
      %225 = sbr.rel (0) target = $region37
    $region36: #{tpu_custom_call.1} parent=1 // pred_region
      %227 = dma.done [#allocation4], 64
    $region37: #{tpu_custom_call.1} parent=1 // pred_fallthru
      _
    %228 = vsyncpa [#allocation3], 1
    %229 = vsyncpa [#allocation6], 1
    %230 = vsyncpa [#allocation4], 1

</llo_original>
